<compile_context>
chip_gen: v5e
topology: v5e:2x2
jax: 0.10.0
libtpu: 0.0.40
codegen_flags: <defaults>
</compile_context>

<pallas_src>
import functools
import math

import jax
import jax.numpy as jnp
from jax.experimental import pallas as pl
from jax.experimental.pallas import tpu as pltpu


def _round_up(n, m):
    return ((n + m - 1) // m) * m


def _mlp_kernel(chunk, compute_dtype, xt_ref, w1_ref, b1_ref, w2_ref, b2_ref,
                w3_ref, b3_ref, o_ref):
    """One batch tile. xt_ref: (2, TB), o_ref: (3, TB); batch on the 128-lane axis.

    The TB lanes are processed in register-resident chunks of `chunk` lanes so the
    (16, TB) activations never materialize in VMEM (no spill vst/vld traffic between
    layers). The Python loop is static -> fully unrolled, static 128-aligned offsets.
    """
    tb = xt_ref.shape[-1]

    # Resident parameters: constant index_map -> DMA'd once per call; hoisted out of
    # the chunk loop so they stay in vregs.
    w1 = w1_ref[...]                          # (16, 2)  f32
    b1 = b1_ref[...]                          # (16, 1)  f32
    w2 = w2_ref[...].astype(compute_dtype)    # (16, 16) MXU input dtype
    b2 = b2_ref[...]                          # (16, 1)  f32
    w3 = w3_ref[...].astype(compute_dtype)    # (3, 16)  MXU input dtype
    b3 = b3_ref[...]                          # (3, 1)   f32
    w1_0 = w1[:, 0:1]
    w1_1 = w1[:, 1:2]

    off = 0
    while off < tb:                           # static Python loop (unrolled)
        c = min(chunk, tb - off)
        x = xt_ref[:, off:off + c]            # (2, c), static aligned slice

        # Layer 1 (K=2): two broadcast FMAs on the VPU in f32 (an MXU matmul with
        # K=2 would be >98% idle).
        h1 = jnp.maximum(w1_0 * x[0:1, :] + w1_1 * x[1:2, :] + b1, 0.0)   # (16, c)

        # Layers 2/3 on the MXU: N = c lanes dense, bf16/f32 inputs per compute_dtype,
        # f32 accumulation, f32 bias add + ReLU.
        h2 = jnp.dot(w2, h1.astype(compute_dtype),
                     preferred_element_type=jnp.float32) + b2
        h2 = jnp.maximum(h2, 0.0)
        y = jnp.dot(w3, h2.astype(compute_dtype),
                    preferred_element_type=jnp.float32) + b3

        o_ref[:, off:off + c] = y.astype(o_ref.dtype)
        off += c


def _default_compute_dtype():
    kind = jax.devices()[0].device_kind.lower()
    # bf16 MXU/VPU inputs pay off on v6e/v7x; v5e (and older) has no bf16 VPU, keep f32.
    if "v6" in kind or "v7" in kind:
        return jnp.bfloat16
    return jnp.float32


def _choose_tiling(batch, block_b):
    """Pick (grid_size g, lanes_per_step tb).

    tb is a multiple of 128, roughly <= block_b; padding g*tb - batch stays small
    (< ~g*128) instead of rounding the whole batch up to a big fixed tile. Once there
    is enough work we force >=2 grid steps so the "parallel" batch axis can be split
    across v7x's two TensorCores (no-op on single-core v5e/v6e).
    """
    b128 = _round_up(max(batch, 1), 128)
    block_b = max(_round_up(block_b, 128), 128)
    g = max(1, pl.cdiv(b128, block_b))
    if g == 1 and b128 >= 2048:
        g = 2
    tb = _round_up(pl.cdiv(b128, g), 128)
    return g, tb


def _normalize_params(params):
    """Accept PyTorch-style params: weights (out, in); biases (out,) or (out, 1)."""
    w1, b1, w2, b2, w3, b3 = params

    def col(b):
        b = jnp.asarray(b, jnp.float32)
        return b.reshape(-1, 1) if b.ndim == 1 else b

    return (jnp.asarray(w1, jnp.float32), col(b1),
            jnp.asarray(w2, jnp.float32), col(b2),
            jnp.asarray(w3, jnp.float32), col(b3))


def simple_nn_forward_fm(xt, params, *, block_b=8192, chunk=512, compute_dtype=None):
    """Feature-major forward: xt is (2, B) f32, returns (3, B) f32.

    Preferred entry point: keeping activations in (features, batch) layout across
    calls avoids the two extra HBM passes that x.T / out.T cost for a memory-bound op.
    """
    w1, b1, w2, b2, w3, b3 = _normalize_params(params)
    f_in, B = xt.shape
    assert f_in == 2 and w1.shape == (16, 2), "expected Linear(2,16) first layer"
    out_dim = w3.shape[0]
    if compute_dtype is None:
        compute_dtype = _default_compute_dtype()

    g, tb = _choose_tiling(B, block_b)
    b_pad = g * tb
    chunk = min(_round_up(chunk, 128), tb)

    xt = xt.astype(jnp.float32)
    if b_pad != B:
        # Zero-padded batch columns only produce discarded outputs.
        xt = jnp.pad(xt, ((0, 0), (0, b_pad - B)))

    def resident(shape):
        # Full-array block, constant index_map -> DMA'd once, VMEM-resident across steps.
        return pl.BlockSpec(shape, lambda i: (0, 0))

    # Per-step VMEM (double-buffered): x = 2*tb*4 B, out = 8*tb*4 B (sublane-padded);
    # < 1 MiB at tb=8192 -> safe on v5e/v6e (32 MiB scoped) and v7x (64 MiB VMEM).
    out_t = pl.pallas_call(
        functools.partial(_mlp_kernel, chunk, compute_dtype),
        out_shape=jax.ShapeDtypeStruct((out_dim, b_pad), jnp.float32),
        grid=(g,),
        in_specs=[
            pl.BlockSpec((2, tb), lambda i: (0, i)),   # batch tiled over lanes
            resident(w1.shape), resident(b1.shape),
            resident(w2.shape), resident(b2.shape),
            resident(w3.shape), resident(b3.shape),
        ],
        out_specs=pl.BlockSpec((out_dim, tb), lambda i: (0, i)),
        compiler_params=pltpu.CompilerParams(
            dimension_semantics=("parallel",),   # megacore split of the batch axis (v7x)
        ),
    )(xt, w1, b1, w2, b2, w3, b3)

    return out_t[:, :B] if b_pad != B else out_t


def simple_nn_forward(x, params, **kwargs):
    """Drop-in PyTorch layout: x (B, 2) -> (B, 3).

    NOTE: the layout conversion (x.T in, .T out) costs two extra HBM passes; pipelines
    that can keep activations feature-major should call simple_nn_forward_fm directly.
    """
    return simple_nn_forward_fm(x.T, params, **kwargs).T


def init_params(key):
    # PyTorch nn.Linear default init: U(-1/sqrt(fan_in), 1/sqrt(fan_in)).
    # Weights stored as (fan_out, fan_in) == PyTorch weight; biases as (fan_out,).
    dims = [(2, 16), (16, 16), (16, 3)]
    params = []
    keys = jax.random.split(key, 2 * len(dims))
    for i, (fan_in, fan_out) in enumerate(dims):
        bound = 1.0 / math.sqrt(fan_in)
        w = jax.random.uniform(keys[2 * i], (fan_out, fan_in), jnp.float32, -bound, bound)
        b = jax.random.uniform(keys[2 * i + 1], (fan_out,), jnp.float32, -bound, bound)
        params += [w, b]
    return tuple(params)


def _reference(x, params):
    # Pure-JAX reference with PyTorch semantics: y = x @ W.T + b.
    w1, b1, w2, b2, w3, b3 = params
    h = jnp.maximum(x @ w1.T + b1, 0.0)
    h = jnp.maximum(h @ w2.T + b2, 0.0)
    return h @ w3.T + b3


if __name__ == "__main__":
    key = jax.random.PRNGKey(0)
    k_params, k_x1, k_x2 = jax.random.split(key, 3)
    params = init_params(k_params)

    # Small demo batch (pads internally to one 128-lane tile).
    B = 8
    x = jax.random.normal(k_x1, (B, 2), jnp.float32)
    ref = _reference(x, params)

    # 1) f32 compute path (exact-ish vs reference).
    out = simple_nn_forward(x, params, compute_dtype=jnp.float32)
    jax.block_until_ready(out)
    assert out.shape == (B, 3)
    assert jnp.allclose(out, ref, atol=1e-5), "f32 path mismatch vs reference"

    # 2) Auto compute dtype (bf16 MXU inputs on v6e/v7x, f32 on v5e) -> looser tolerance.
    out_auto = simple_nn_forward(x, params)
    jax.block_until_ready(out_auto)
    assert jnp.allclose(out_auto, ref, atol=1e-1, rtol=5e-2), "auto-dtype path mismatch"

    # 3) Feature-major entry point (no wrapper transposes).
    out_fm = simple_nn_forward_fm(x.T, params, compute_dtype=jnp.float32)
    jax.block_until_ready(out_fm)
    assert out_fm.shape == (3, B)
    assert jnp.allclose(out_fm.T, ref, atol=1e-5), "feature-major path mismatch"

    # 4) Larger batch to exercise the chunked inner loop (512,512,128 lane chunks).
    B2 = 1152
    x2 = jax.random.normal(k_x2, (B2, 2), jnp.float32)
    out2 = simple_nn_forward(x2, params, compute_dtype=jnp.float32)
    jax.block_until_ready(out2)
    assert out2.shape == (B2, 3)
    assert jnp.allclose(out2, _reference(x2, params), atol=1e-5), "chunked path mismatch"

    print("KERNEL_OK")
</pallas_src>

<mosaic_0001>
module attributes {stable_mosaic.version = 11 : i64} {
  func.func @_mlp_kernel(%arg0: i32, %arg1: memref<2x128xf32, #tpu.memory_space<vmem>>, %arg2: memref<16x2xf32, #tpu.memory_space<vmem>>, %arg3: memref<16x1xf32, #tpu.memory_space<vmem>>, %arg4: memref<16x16xf32, #tpu.memory_space<vmem>>, %arg5: memref<16x1xf32, #tpu.memory_space<vmem>>, %arg6: memref<3x16xf32, #tpu.memory_space<vmem>>, %arg7: memref<3x1xf32, #tpu.memory_space<vmem>>, %arg8: memref<3x128xf32, #tpu.memory_space<vmem>>) attributes {dimension_semantics = [#tpu.dimension_semantics<parallel>], iteration_bounds = array<i64: 1>, scalar_prefetch = 0 : i64, scratch_operands = 0 : i64, tpu.core_type = #tpu.core_type<tc>, window_params = [{transform_indices = @transform_0, window_bounds = array<i64: 2, 128>}, {pipeline_mode = #tpu.pipeline_mode<synchronous>, transform_indices = @transform_1, window_bounds = array<i64: 16, 2>}, {pipeline_mode = #tpu.pipeline_mode<synchronous>, transform_indices = @transform_2, window_bounds = array<i64: 16, 1>}, {pipeline_mode = #tpu.pipeline_mode<synchronous>, transform_indices = @transform_3, window_bounds = array<i64: 16, 16>}, {pipeline_mode = #tpu.pipeline_mode<synchronous>, transform_indices = @transform_4, window_bounds = array<i64: 16, 1>}, {pipeline_mode = #tpu.pipeline_mode<synchronous>, transform_indices = @transform_5, window_bounds = array<i64: 3, 16>}, {pipeline_mode = #tpu.pipeline_mode<synchronous>, transform_indices = @transform_6, window_bounds = array<i64: 3, 1>}, {transform_indices = @transform_7, window_bounds = array<i64: 3, 128>}]} {
    %c0 = arith.constant 0 : index
    %c0_0 = arith.constant 0 : index
    %0 = vector.load %arg2[%c0, %c0_0] : memref<16x2xf32, #tpu.memory_space<vmem>>, vector<16x2xf32>
    %c0_1 = arith.constant 0 : index
    %c0_2 = arith.constant 0 : index
    %1 = vector.load %arg3[%c0_1, %c0_2] : memref<16x1xf32, #tpu.memory_space<vmem>>, vector<16x1xf32>
    %c0_3 = arith.constant 0 : index
    %c0_4 = arith.constant 0 : index
    %2 = vector.load %arg4[%c0_3, %c0_4] : memref<16x16xf32, #tpu.memory_space<vmem>>, vector<16x16xf32>
    %c0_5 = arith.constant 0 : index
    %c0_6 = arith.constant 0 : index
    %3 = vector.load %arg5[%c0_5, %c0_6] : memref<16x1xf32, #tpu.memory_space<vmem>>, vector<16x1xf32>
    %c0_7 = arith.constant 0 : index
    %c0_8 = arith.constant 0 : index
    %4 = vector.load %arg6[%c0_7, %c0_8] : memref<3x16xf32, #tpu.memory_space<vmem>>, vector<3x16xf32>
    %c0_9 = arith.constant 0 : index
    %c0_10 = arith.constant 0 : index
    %5 = vector.load %arg7[%c0_9, %c0_10] : memref<3x1xf32, #tpu.memory_space<vmem>>, vector<3x1xf32>
    %6 = vector.extract_strided_slice %0 {offsets = [0, 0], sizes = [16, 1], strides = [1, 1]} : vector<16x2xf32> to vector<16x1xf32>
    %7 = vector.extract_strided_slice %0 {offsets = [0, 1], sizes = [16, 1], strides = [1, 1]} : vector<16x2xf32> to vector<16x1xf32>
    %c0_11 = arith.constant 0 : index
    %c0_12 = arith.constant 0 : index
    %8 = vector.load %arg1[%c0_11, %c0_12] : memref<2x128xf32, #tpu.memory_space<vmem>>, vector<2x128xf32>
    %9 = vector.extract_strided_slice %8 {offsets = [0, 0], sizes = [1, 128], strides = [1, 1]} : vector<2x128xf32> to vector<1x128xf32>
    %10 = vector.broadcast %6 : vector<16x1xf32> to vector<16x128xf32>
    %11 = vector.broadcast %9 : vector<1x128xf32> to vector<16x128xf32>
    %12 = arith.mulf %10, %11 : vector<16x128xf32>
    %13 = vector.extract_strided_slice %8 {offsets = [1, 0], sizes = [1, 128], strides = [1, 1]} : vector<2x128xf32> to vector<1x128xf32>
    %14 = vector.broadcast %7 : vector<16x1xf32> to vector<16x128xf32>
    %15 = vector.broadcast %13 : vector<1x128xf32> to vector<16x128xf32>
    %16 = arith.mulf %14, %15 : vector<16x128xf32>
    %17 = arith.addf %12, %16 : vector<16x128xf32>
    %18 = vector.broadcast %1 : vector<16x1xf32> to vector<16x128xf32>
    %19 = arith.addf %17, %18 : vector<16x128xf32>
    %cst = arith.constant 0.000000e+00 : f32
    %20 = vector.broadcast %cst : f32 to vector<16x128xf32>
    %21 = arith.maximumf %19, %20 : vector<16x128xf32>
    %cst_13 = arith.constant dense<0.000000e+00> : vector<16x128xf32>
    %22 = tpu.matmul %2, %21, %cst_13 {dimension_numbers = #tpu.dot_dimension_numbers<[1], [0], [0], [1], [0, 0, 1, 1], [], []>} : vector<16x16xf32>, vector<16x128xf32>, vector<16x128xf32> -> vector<16x128xf32>
    %23 = vector.broadcast %3 : vector<16x1xf32> to vector<16x128xf32>
    %24 = arith.addf %22, %23 : vector<16x128xf32>
    %cst_14 = arith.constant 0.000000e+00 : f32
    %25 = vector.broadcast %cst_14 : f32 to vector<16x128xf32>
    %26 = arith.maximumf %24, %25 : vector<16x128xf32>
    %cst_15 = arith.constant dense<0.000000e+00> : vector<3x128xf32>
    %27 = tpu.matmul %4, %26, %cst_15 {dimension_numbers = #tpu.dot_dimension_numbers<[1], [0], [0], [1], [0, 0, 1, 1], [], []>} : vector<3x16xf32>, vector<16x128xf32>, vector<3x128xf32> -> vector<3x128xf32>
    %28 = vector.broadcast %5 : vector<3x1xf32> to vector<3x128xf32>
    %29 = arith.addf %27, %28 : vector<3x128xf32>
    %c0_16 = arith.constant 0 : index
    %c0_17 = arith.constant 0 : index
    %30 = vector.load %arg8[%c0_16, %c0_17] : memref<3x128xf32, #tpu.memory_space<vmem>>, vector<3x128xf32>
    tpu.vector_store %arg8[%c0_16, %c0_17], %29 {strides = array<i32>} : memref<3x128xf32, #tpu.memory_space<vmem>>, vector<3x128xf32>,
    return
  }
  func.func @transform_0(%arg0: i32) -> (i32, i32) {
    %c0_i32 = arith.constant 0 : i32
    %c0_i32_0 = arith.constant 0 : i32
    return %c0_i32, %arg0 : i32, i32
  }
  func.func @transform_1(%arg0: i32) -> (i32, i32) {
    %c0_i32 = arith.constant 0 : i32
    %c0_i32_0 = arith.constant 0 : i32
    %c0_i32_1 = arith.constant 0 : i32
    return %c0_i32, %c0_i32_0 : i32, i32
  }
  func.func @transform_2(%arg0: i32) -> (i32, i32) {
    %c0_i32 = arith.constant 0 : i32
    %c0_i32_0 = arith.constant 0 : i32
    %c0_i32_1 = arith.constant 0 : i32
    return %c0_i32, %c0_i32_0 : i32, i32
  }
  func.func @transform_3(%arg0: i32) -> (i32, i32) {
    %c0_i32 = arith.constant 0 : i32
    %c0_i32_0 = arith.constant 0 : i32
    %c0_i32_1 = arith.constant 0 : i32
    return %c0_i32, %c0_i32_0 : i32, i32
  }
  func.func @transform_4(%arg0: i32) -> (i32, i32) {
    %c0_i32 = arith.constant 0 : i32
    %c0_i32_0 = arith.constant 0 : i32
    %c0_i32_1 = arith.constant 0 : i32
    return %c0_i32, %c0_i32_0 : i32, i32
  }
  func.func @transform_5(%arg0: i32) -> (i32, i32) {
    %c0_i32 = arith.constant 0 : i32
    %c0_i32_0 = arith.constant 0 : i32
    %c0_i32_1 = arith.constant 0 : i32
    return %c0_i32, %c0_i32_0 : i32, i32
  }
  func.func @transform_6(%arg0: i32) -> (i32, i32) {
    %c0_i32 = arith.constant 0 : i32
    %c0_i32_0 = arith.constant 0 : i32
    %c0_i32_1 = arith.constant 0 : i32
    return %c0_i32, %c0_i32_0 : i32, i32
  }
  func.func @transform_7(%arg0: i32) -> (i32, i32) {
    %c0_i32 = arith.constant 0 : i32
    %c0_i32_0 = arith.constant 0 : i32
    return %c0_i32, %arg0 : i32, i32
  }
}

</mosaic_0001>

<llo_original>
// kernel: tpu_custom_call.1
$region0: #{tpu_custom_call.1}
  #allocation0 [shape = 'u32[]', space=smem, size = 0x4, offset = 0x4, fixed_abs, tag = 'smem constant byte address 0x4 - core index']
  #allocation1 [shape = 'u32[72,128]{1,0:T(1,128)}', space=vmem, size = 0x9000, scoped, tag = 'internal scratch']
  %s0 = inlined_call_operand.vmem [shape: f32[2,128], index: 0, kind: input, shape index: {}]
  %s1 = inlined_call_operand.vmem [shape: f32[16,2], index: 1, kind: input, shape index: {}]
  %s2 = inlined_call_operand.vmem [shape: f32[16,1], index: 2, kind: input, shape index: {}]
  %s3 = inlined_call_operand.vmem [shape: f32[16,16], index: 3, kind: input, shape index: {}]
  %s4 = inlined_call_operand.vmem [shape: f32[16,1], index: 4, kind: input, shape index: {}]
  %s5 = inlined_call_operand.vmem [shape: f32[3,16], index: 5, kind: input, shape index: {}]
  %s6 = inlined_call_operand.vmem [shape: f32[3,1], index: 6, kind: input, shape index: {}]
  %s7 = inlined_call_operand.hbm [shape: f32[3,128], index: 7, kind: output, shape index: {}]
  %s8 = sld [smem:[#allocation0]]
  $region38: #{tpu_custom_call.1} parent=0
    _
  %s10 = ssub.s32 1, %s8
  %s11 = scalar_select 0, %s10, %s8
  $region1: #{tpu_custom_call.1} parent=0
    #allocation2 [shape = 'u8[2048]{0}', space=vmem, size = 0x800, scoped, tag = 'output window, operand 0, single buffered']
    #allocation3 [shape = 's32[1]{0}', space=sflag, size = 0x4, scoped, tag = 'scoped memory for tpu_custom_call.1']
    %12 = vsyncpa [#allocation3], 0
    // Predicated region
    $region2: #{tpu_custom_call.1} parent=1 // pred_check
      _
    $region3: #{tpu_custom_call.1} parent=1 // pred_check_branch
      %14 = sbr.rel (0) target = $region5
    $region4: #{tpu_custom_call.1} parent=1 // pred_region
      _
    $region5: #{tpu_custom_call.1} parent=1 // pred_fallthru
      _
    // Predicated region
    $region6: #{tpu_custom_call.1} parent=1 // pred_check
      _
    $region7: #{tpu_custom_call.1} parent=1 // pred_check_branch
      %16 = sbr.rel (0) target = $region9
    $region8: #{tpu_custom_call.1} parent=1 // pred_region
      _
    $region9: #{tpu_custom_call.1} parent=1 // pred_fallthru
      _
    // Predicated region
    $region10: #{tpu_custom_call.1} parent=1 // pred_check
      _
    $region11: #{tpu_custom_call.1} parent=1 // pred_check_branch
      %18 = sbr.rel (0) target = $region13
    $region12: #{tpu_custom_call.1} parent=1 // pred_region
      _
    $region13: #{tpu_custom_call.1} parent=1 // pred_fallthru
      _
    // Predicated region
    $region14: #{tpu_custom_call.1} parent=1 // pred_check
      _
    $region15: #{tpu_custom_call.1} parent=1 // pred_check_branch
      %20 = sbr.rel (0) target = $region17
    $region16: #{tpu_custom_call.1} parent=1 // pred_region
      _
    $region17: #{tpu_custom_call.1} parent=1 // pred_fallthru
      _
    // Predicated region
    $region18: #{tpu_custom_call.1} parent=1 // pred_check
      _
    $region19: #{tpu_custom_call.1} parent=1 // pred_check_branch
      %22 = sbr.rel (0) target = $region21
    $region20: #{tpu_custom_call.1} parent=1 // pred_region
      _
    $region21: #{tpu_custom_call.1} parent=1 // pred_fallthru
      _
    // Predicated region
    $region22: #{tpu_custom_call.1} parent=1 // pred_check
      _
    $region23: #{tpu_custom_call.1} parent=1 // pred_check_branch
      %24 = sbr.rel (0) target = $region25
    $region24: #{tpu_custom_call.1} parent=1 // pred_region
      _
    $region25: #{tpu_custom_call.1} parent=1 // pred_fallthru
      _
    // Predicated region
    $region26: #{tpu_custom_call.1} parent=1 // pred_check
      _
    $region27: #{tpu_custom_call.1} parent=1 // pred_check_branch
      %26 = sbr.rel (0) target = $region29
    $region28: #{tpu_custom_call.1} parent=1 // pred_region
      _
    $region29: #{tpu_custom_call.1} parent=1 // pred_fallthru
      _
    %v27 = vld [vmem:[%s1] sm:$0xff]
    %v28 = vld [vmem:[%s1 + $0x8] sm:$0xff]
    %v29 = vld [vmem:[%s2] sm:$0xff]
    %v30 = vld [vmem:[%s2 + $0x8] sm:$0xff]
    %v31 = vld [vmem:[%s3] sm:$0xff]
    %v32 = vld [vmem:[%s3 + $0x8] sm:$0xff]
    %v33 = vld [vmem:[%s4] sm:$0xff]
    %v34 = vld [vmem:[%s4 + $0x8] sm:$0xff]
    %v35 = vld [vmem:[%s5] sm:$0x7]
    %v36 = vld [vmem:[%s6] sm:$0x7]
    %v37 = vld [vmem:[%s0] sm:$0x3]
    %39 = vset.pattern.permute.xlu0 0
    %40 = vperm.xlu0 %39, %v27
    %v41 = vpop.permute.xlu0 %40
    %44 = vset.pattern.permute.xlu0 0
    %45 = vperm.xlu0 %44, %v28
    %v46 = vpop.permute.xlu0 %45
    %v48 = vperm.slane %v37, 0
    %v49 = vmul.f32 %v41, %v48
    %v50 = vmul.f32 %v46, %v48
    %51 = vset.pattern.permute.xlu0 1
    %52 = vperm.xlu0 %51, %v27
    %v53 = vpop.permute.xlu0 %52
    %55 = vset.pattern.permute.xlu0 1
    %56 = vperm.xlu0 %55, %v28
    %v57 = vpop.permute.xlu0 %56
    %v59 = vperm.slane %v37, 1
    %v60 = vmul.f32 %v53, %v59
    %v61 = vmul.f32 %v57, %v59
    %v62 = vadd.f32 %v49, %v60
    %v63 = vadd.f32 %v50, %v61
    %65 = vset.pattern.permute.xlu0 0
    %66 = vperm.xlu0 %65, %v29
    %v67 = vpop.permute.xlu0 %66
    %70 = vset.pattern.permute.xlu0 0
    %71 = vperm.xlu0 %70, %v30
    %v72 = vpop.permute.xlu0 %71
    %v74 = vadd.f32 %v62, %v67
    %v75 = vadd.f32 %v63, %v72
    %v76 = vmax.f32 %v74, 0.0
    %v77 = vmax.f32 %v75, 0.0
    %79 = vset.pattern.permute.xlu0 0
    %80 = vperm.xlu0 %79, %v33
    %v81 = vpop.permute.xlu0 %80
    %84 = vset.pattern.permute.xlu0 0
    %85 = vperm.xlu0 %84, %v34
    %v86 = vpop.permute.xlu0 %85
    %vm88 = vcmask 130048
    %v90 = vsel %vm88, %v31, 0
    %v93 = vsel %vm88, %v32, 0
    %95 = vmatpush.msra.mxu0 0.0
    %96 = vmatpush.msra.mxu0 0.0
    %97 = vmatpush.msra.mxu0 0.0
    %98 = vmatpush.msra.mxu0 0.0
    %99 = vmatpush.msra.mxu0 0.0
    %100 = vmatpush.msra.mxu0 0.0
    %101 = vmatpush.msra.mxu0 0.0
    %102 = vmatpush.msra.mxu0 0.0
    %103 = vmatpush.msra.mxu0 0.0
    %104 = vmatpush.msra.mxu0 0.0
    %105 = vmatpush.msra.mxu0 0.0
    %106 = vmatpush.msra.mxu0 0.0
    %107 = vmatpush.msra.mxu0 0.0
    %108 = vmatpush.msra.mxu0 0.0
    %109 = vmatpush.msra.mxu0 %v77
    %110 = vmatpush.msra.mxu0 %v76
    %111 = vmatmul.f32.gmra.mxu0 %v90
    %v112 = vpop.f32.mrf.mxu0
    %v113 = vadd.f32 %v81, %v112
    %114 = vmatmul.f32.gmra.mxu0 %v93
    %v115 = vpop.f32.mrf.mxu0
    %v116 = vadd.f32 %v86, %v115
    %117 = vdwg.mxu0
    %v118 = vmax.f32 %v113, 0.0
    %v119 = vmax.f32 %v116, 0.0
    %121 = vset.pattern.permute.xlu0 0
    %122 = vperm.xlu0 %121, %v36
    %v123 = vpop.permute.xlu0 %122
    %v126 = vsel %vm88, %v35, 0
    %128 = vmatpush.msra.mxu0 0.0
    %129 = vmatpush.msra.mxu0 0.0
    %130 = vmatpush.msra.mxu0 0.0
    %131 = vmatpush.msra.mxu0 0.0
    %132 = vmatpush.msra.mxu0 0.0
    %133 = vmatpush.msra.mxu0 0.0
    %134 = vmatpush.msra.mxu0 0.0
    %135 = vmatpush.msra.mxu0 0.0
    %136 = vmatpush.msra.mxu0 0.0
    %137 = vmatpush.msra.mxu0 0.0
    %138 = vmatpush.msra.mxu0 0.0
    %139 = vmatpush.msra.mxu0 0.0
    %140 = vmatpush.msra.mxu0 0.0
    %141 = vmatpush.msra.mxu0 0.0
    %142 = vmatpush.msra.mxu0 %v119
    %143 = vmatpush.msra.mxu0 %v118
    %144 = vmatmul.f32.gmra.mxu0 %v126
    %v145 = vpop.f32.mrf.mxu0
    %v146 = vadd.f32 %v123, %v145
    %147 = vdwg.mxu0
    %148 = vst [vmem:[#allocation2] sm:$0x7] %v146
    // Predicated region
    $region30: #{tpu_custom_call.1} parent=1 // pred_check
      _
    $region31: #{tpu_custom_call.1} parent=1 // pred_check_branch
      %150 = sbr.rel (0) target = $region33
    $region32: #{tpu_custom_call.1} parent=1 // pred_region
      %152 = vsyncadd [#allocation3], 0
      %s154 = sshll.u32 [#allocation2], 4
      %s155 = int_to_ptr.vmem [resolvable:$true] %s154
      %s156 = sshll.u32 %s7, 4
      %s157 = int_to_ptr.hbm [resolvable:$true] %s156
      %159 = dma.vmem_to_hbm [thread:$0]  %s155, 64, %s157, [#allocation3]
    $region33: #{tpu_custom_call.1} parent=1 // pred_fallthru
      _
    // Predicated region
    $region34: #{tpu_custom_call.1} parent=1 // pred_check
      _
    $region35: #{tpu_custom_call.1} parent=1 // pred_check_branch
      %161 = sbr.rel (0) target = $region37
    $region36: #{tpu_custom_call.1} parent=1 // pred_region
      %163 = dma.done [#allocation3], 64
    $region37: #{tpu_custom_call.1} parent=1 // pred_fallthru
      _
    %164 = vsyncpa [#allocation3], 1

</llo_original>
